<compile_context>
chip_gen: v6e
topology: v6e:2x2x1
jax: 0.10.0
libtpu: 0.0.40
codegen_flags: <defaults>
</compile_context>

<pallas_src>
import functools

import jax
import jax.numpy as jnp
import numpy as np
from jax import lax
from jax.experimental import pallas as pl
from jax.experimental.pallas import tpu as pltpu

OUT_SIZE = 384        # fixed by the PyTorch module: F.interpolate(size=(384, 384))
ROW_CHUNK = 64        # 384 = 6 * 64; bounds live vregs of each row-resize matmul
_N_ROW_CHUNKS = OUT_SIZE // ROW_CHUNK


def _bilinear_matrix_np(in_size: int, out_size: int) -> np.ndarray:
    """Row-interpolation matrix (out_size, in_size) for bilinear resize,
    matching PyTorch align_corners=False semantics. Built with NumPy so it is
    a baked-in constant at trace time (no on-device scatter)."""
    scale = in_size / out_size
    dst = np.arange(out_size, dtype=np.float64)
    src = np.maximum((dst + 0.5) * scale - 0.5, 0.0)
    i0 = np.minimum(np.floor(src).astype(np.int64), in_size - 1)
    frac = src - i0
    i1 = np.minimum(i0 + 1, in_size - 1)
    rows = np.arange(out_size)
    m = np.zeros((out_size, in_size), dtype=np.float32)
    np.add.at(m, (rows, i0), 1.0 - frac)
    np.add.at(m, (rows, i1), frac)
    return m


def _depth_kernel(wc_ref, x_ref, wh_ref, wwt_ref, o_ref, tmp_ref, *,
                  num_channels, block_b):
    # wc_ref : SMEM (C+1,)              -- channel weights + bias of the head
    # x_ref  : VMEM (block_b, C, H, W)  -- block_b batch elements (NCHW)
    # wh_ref : VMEM (384, H)            -- row interpolation matrix
    # wwt_ref: VMEM (W, 384)            -- transposed column interpolation matrix
    # o_ref  : VMEM (block_b, 384, 384)
    # tmp_ref: VMEM scratch (block_b, H, 384) -- lane-dense column-resize result
    C = num_channels
    H = x_ref.shape[2]
    W = x_ref.shape[3]

    # ---- Synthetic depth head: 1x1 conv over channels + bias + ReLU (VPU).
    # One channel slice live at a time; only `depth` accumulates.
    # TODO(synk): switch to an MXU contraction over C for real channel widths.
    depth = wc_ref[0] * x_ref[:, 0]
    for c in range(1, C):
        depth = depth + wc_ref[c] * x_ref[:, c]
    depth = jnp.maximum(depth + wc_ref[C], 0.0)            # (block_b, H, W) f32

    # ---- Column resize: single stacked lane-dense MXU matmul for the block.
    if H % 8 == 0:
        tmp = jnp.dot(depth.reshape(block_b * H, W), wwt_ref[...],
                      preferred_element_type=jnp.float32)  # (block_b*H, 384)
        tmp_ref[...] = tmp.reshape(block_b, H, OUT_SIZE)
    else:
        # TODO(synk): relayout-free stacking only when H % 8 == 0.
        for bi in range(block_b):
            tmp_ref[bi] = jnp.dot(depth[bi], wwt_ref[...],
                                  preferred_element_type=jnp.float32)

    # ---- Row resize: fori_loop over (batch element, 64-row output chunk).
    # Each iteration: one small MXU matmul + immediate lane-dense store, so the
    # live-value footprint stays well inside the 64-vreg file (no spills onto
    # the store path that carries the dominant f32 writeback).
    def outer(bi, carry):
        tmp_bi = tmp_ref[bi]                               # (H, 384)

        def inner(ci, c2):
            r = pl.multiple_of(ci * ROW_CHUNK, ROW_CHUNK)
            rows = jnp.dot(wh_ref[pl.ds(r, ROW_CHUNK), :], tmp_bi,
                           preferred_element_type=jnp.float32)  # (64, 384)
            o_ref[bi, pl.ds(r, ROW_CHUNK), :] = rows
            return c2

        return lax.fori_loop(0, _N_ROW_CHUNKS, inner, carry)

    lax.fori_loop(0, block_b, outer, 0)


def _tensorcores_per_chip() -> int:
    """2 for megacore chips (v7x, v4); 1 for v5e/v6e (single TensorCore)."""
    try:
        kind = jax.devices()[0].device_kind.lower()
    except Exception:
        return 1
    return 2 if any(tag in kind for tag in ("v7", "v4")) else 1


def _pad(n: int, m: int) -> int:
    return -(-n // m) * m


def depth_model_forward(x: jnp.ndarray, wc: jnp.ndarray,
                        block_b: int | None = None) -> jnp.ndarray:
    """x: (B, C, H, W) float32 NCHW; wc: (C+1,) head weights (+bias).
    Returns (B, 1, 384, 384) float32."""
    B, C, H, W = x.shape

    if block_b is None:
        if _tensorcores_per_chip() >= 2 and B >= 2:
            # Keep >= 2 grid steps so the "parallel" batch axis feeds both TCs.
            block_b = max(1, min(8, B // 2))
        else:
            # Single TensorCore: a grid of 1 is fine; amortize per-step overhead.
            block_b = min(8, B)
    while B % block_b:
        block_b -= 1

    wh = jnp.asarray(_bilinear_matrix_np(H, OUT_SIZE))          # (384, H)
    wwt = jnp.asarray(_bilinear_matrix_np(W, OUT_SIZE).T)       # (W, 384)

    kernel = functools.partial(_depth_kernel, num_channels=C, block_b=block_b)

    # Explicit VMEM budget: padded, double-buffered tiles + scratch + headroom.
    by = 4
    x_tile = block_b * C * _pad(H, 8) * _pad(W, 128) * by
    wh_tile = _pad(OUT_SIZE, 8) * _pad(H, 128) * by
    wwt_tile = _pad(W, 8) * _pad(OUT_SIZE, 128) * by
    out_tile = block_b * _pad(OUT_SIZE, 8) * _pad(OUT_SIZE, 128) * by
    tmp_bytes = block_b * _pad(H, 8) * _pad(OUT_SIZE, 128) * by
    needed = 2 * (x_tile + wh_tile + wwt_tile + out_tile) + tmp_bytes
    vmem_limit = int(min(2 * needed + (8 << 20), 48 << 20))

    # Memory-bound cost hint: bytes dominated by the f32 output writeback.
    flops = B * (2 * C * H * W
                 + 2 * H * W * OUT_SIZE
                 + 2 * OUT_SIZE * H * OUT_SIZE)
    bytes_accessed = (B * C * H * W + (C + 1) + OUT_SIZE * H + W * OUT_SIZE
                      + B * OUT_SIZE * OUT_SIZE) * by

    out = pl.pallas_call(
        kernel,
        out_shape=jax.ShapeDtypeStruct((B, OUT_SIZE, OUT_SIZE), jnp.float32),
        grid_spec=pltpu.PrefetchScalarGridSpec(
            num_scalar_prefetch=0,
            grid=(B // block_b,),
            in_specs=[
                pl.BlockSpec(memory_space=pltpu.MemorySpace.SMEM),            # wc
                pl.BlockSpec((block_b, C, H, W), lambda b: (b, 0, 0, 0)),     # x
                pl.BlockSpec((OUT_SIZE, H), lambda b: (0, 0)),                # wh
                pl.BlockSpec((W, OUT_SIZE), lambda b: (0, 0)),                # wwt
            ],
            out_specs=pl.BlockSpec((block_b, OUT_SIZE, OUT_SIZE),
                                   lambda b: (b, 0, 0)),
            scratch_shapes=[pltpu.VMEM((block_b, H, OUT_SIZE), jnp.float32)],
        ),
        compiler_params=pltpu.CompilerParams(
            dimension_semantics=("parallel",),
            vmem_limit_bytes=vmem_limit,
        ),
        cost_estimate=pl.CostEstimate(flops=flops, transcendentals=0,
                                      bytes_accessed=bytes_accessed),
    )(wc, x, wh, wwt)

    # Match the PyTorch module's (B, 1, 384, 384) output; free metadata reshape.
    return out[:, None, :, :]


def _reference(x, wc):
    """Pure-JAX reference with identical math (correctness check)."""
    B, C, H, W = x.shape
    depth = jnp.einsum("c,bchw->bhw", wc[:C], x) + wc[C]
    depth = jnp.maximum(depth, 0.0)
    wh = jnp.asarray(_bilinear_matrix_np(H, OUT_SIZE))
    ww = jnp.asarray(_bilinear_matrix_np(W, OUT_SIZE))
    up = jnp.einsum("oh,bhw,pw->bop", wh, depth, ww)
    return up[:, None, :, :]


if __name__ == "__main__":
    key = jax.random.PRNGKey(0)
    kx, kw = jax.random.split(key)

    # B=4 so the batched grid step and (on megacore chips) a 2-step grid are
    # both exercised; C/H/W small and consistent with the module's NCHW input.
    B, C, H, W = 4, 4, 16, 16
    x = jax.random.normal(kx, (B, C, H, W), dtype=jnp.float32)
    wc = jax.random.normal(kw, (C + 1,), dtype=jnp.float32)  # head weights + bias

    out = jax.block_until_ready(depth_model_forward(x, wc))

    assert out.shape == (B, 1, OUT_SIZE, OUT_SIZE), out.shape
    assert out.dtype == jnp.float32, out.dtype

    ref = jax.block_until_ready(_reference(x, wc))
    np.testing.assert_allclose(np.asarray(out), np.asarray(ref),
                               rtol=1e-5, atol=1e-5)

    print("KERNEL_OK")
</pallas_src>

<mosaic_0001>
module attributes {stable_mosaic.version = 11 : i64} {
  func.func @_depth_kernel(%arg0: i32, %arg1: memref<5xf32, #tpu.memory_space<smem>>, %arg2: memref<4x4x16x16xf32, #tpu.memory_space<vmem>>, %arg3: memref<384x16xf32, #tpu.memory_space<vmem>>, %arg4: memref<16x384xf32, #tpu.memory_space<vmem>>, %arg5: memref<4x384x384xf32, #tpu.memory_space<vmem>>, %arg6: memref<4x16x384xf32, #tpu.memory_space<vmem>>) attributes {dimension_semantics = [#tpu.dimension_semantics<parallel>], iteration_bounds = array<i64: 1>, scalar_prefetch = 0 : i64, scratch_operands = 1 : i64, tpu.core_type = #tpu.core_type<tc>, window_params = [{transform_indices = @transform_0, window_bounds = array<i64: 5>}, {transform_indices = @transform_1, window_bounds = array<i64: 4, 4, 16, 16>}, {pipeline_mode = #tpu.pipeline_mode<synchronous>, transform_indices = @transform_2, window_bounds = array<i64: 384, 16>}, {pipeline_mode = #tpu.pipeline_mode<synchronous>, transform_indices = @transform_3, window_bounds = array<i64: 16, 384>}, {transform_indices = @transform_4, window_bounds = array<i64: 4, 384, 384>}]} {
    %c0 = arith.constant 0 : index
    %0 = memref.load %arg1[%c0] : memref<5xf32, #tpu.memory_space<smem>>
    %c0_0 = arith.constant 0 : index
    %c0_1 = arith.constant 0 : index
    %c0_2 = arith.constant 0 : index
    %c0_3 = arith.constant 0 : index
    %1 = vector.load %arg2[%c0_0, %c0_1, %c0_2, %c0_3] : memref<4x4x16x16xf32, #tpu.memory_space<vmem>>, vector<4x1x16x16xf32>
    %2 = vector.shape_cast %1 : vector<4x1x16x16xf32> to vector<4x16x16xf32>
    %3 = vector.broadcast %0 : f32 to vector<4x16x16xf32>
    %4 = arith.mulf %3, %2 : vector<4x16x16xf32>
    %c1 = arith.constant 1 : index
    %5 = memref.load %arg1[%c1] : memref<5xf32, #tpu.memory_space<smem>>
    %c0_4 = arith.constant 0 : index
    %c1_5 = arith.constant 1 : index
    %c0_6 = arith.constant 0 : index
    %c0_7 = arith.constant 0 : index
    %6 = vector.load %arg2[%c0_4, %c1_5, %c0_6, %c0_7] : memref<4x4x16x16xf32, #tpu.memory_space<vmem>>, vector<4x1x16x16xf32>
    %7 = vector.shape_cast %6 : vector<4x1x16x16xf32> to vector<4x16x16xf32>
    %8 = vector.broadcast %5 : f32 to vector<4x16x16xf32>
    %9 = arith.mulf %8, %7 : vector<4x16x16xf32>
    %10 = arith.addf %4, %9 : vector<4x16x16xf32>
    %c2 = arith.constant 2 : index
    %11 = memref.load %arg1[%c2] : memref<5xf32, #tpu.memory_space<smem>>
    %c0_8 = arith.constant 0 : index
    %c2_9 = arith.constant 2 : index
    %c0_10 = arith.constant 0 : index
    %c0_11 = arith.constant 0 : index
    %12 = vector.load %arg2[%c0_8, %c2_9, %c0_10, %c0_11] : memref<4x4x16x16xf32, #tpu.memory_space<vmem>>, vector<4x1x16x16xf32>
    %13 = vector.shape_cast %12 : vector<4x1x16x16xf32> to vector<4x16x16xf32>
    %14 = vector.broadcast %11 : f32 to vector<4x16x16xf32>
    %15 = arith.mulf %14, %13 : vector<4x16x16xf32>
    %16 = arith.addf %10, %15 : vector<4x16x16xf32>
    %c3 = arith.constant 3 : index
    %17 = memref.load %arg1[%c3] : memref<5xf32, #tpu.memory_space<smem>>
    %c0_12 = arith.constant 0 : index
    %c3_13 = arith.constant 3 : index
    %c0_14 = arith.constant 0 : index
    %c0_15 = arith.constant 0 : index
    %18 = vector.load %arg2[%c0_12, %c3_13, %c0_14, %c0_15] : memref<4x4x16x16xf32, #tpu.memory_space<vmem>>, vector<4x1x16x16xf32>
    %19 = vector.shape_cast %18 : vector<4x1x16x16xf32> to vector<4x16x16xf32>
    %20 = vector.broadcast %17 : f32 to vector<4x16x16xf32>
    %21 = arith.mulf %20, %19 : vector<4x16x16xf32>
    %22 = arith.addf %16, %21 : vector<4x16x16xf32>
    %c4 = arith.constant 4 : index
    %23 = memref.load %arg1[%c4] : memref<5xf32, #tpu.memory_space<smem>>
    %24 = vector.broadcast %23 : f32 to vector<4x16x16xf32>
    %25 = arith.addf %22, %24 : vector<4x16x16xf32>
    %cst = arith.constant 0.000000e+00 : f32
    %26 = vector.broadcast %cst : f32 to vector<4x16x16xf32>
    %27 = arith.maximumf %25, %26 : vector<4x16x16xf32>
    %28 = vector.shape_cast %27 : vector<4x16x16xf32> to vector<64x16xf32>
    %c0_16 = arith.constant 0 : index
    %c0_17 = arith.constant 0 : index
    %29 = vector.load %arg4[%c0_16, %c0_17] : memref<16x384xf32, #tpu.memory_space<vmem>>, vector<16x384xf32>
    %cst_18 = arith.constant dense<0.000000e+00> : vector<64x384xf32>
    %30 = tpu.matmul %28, %29, %cst_18 {dimension_numbers = #tpu.dot_dimension_numbers<[1], [0], [0], [1], [0, 0, 1, 1], [], []>} : vector<64x16xf32>, vector<16x384xf32>, vector<64x384xf32> -> vector<64x384xf32>
    %31 = vector.shape_cast %30 : vector<64x384xf32> to vector<4x16x384xf32>
    %c0_19 = arith.constant 0 : index
    %c0_20 = arith.constant 0 : index
    %c0_21 = arith.constant 0 : index
    %32 = vector.load %arg6[%c0_19, %c0_20, %c0_21] : memref<4x16x384xf32, #tpu.memory_space<vmem>>, vector<4x16x384xf32>
    tpu.vector_store %arg6[%c0_19, %c0_20, %c0_21], %31 {strides = array<i32>} : memref<4x16x384xf32, #tpu.memory_space<vmem>>, vector<4x16x384xf32>,
    %c0_i32 = arith.constant 0 : i32
    %c4_i32 = arith.constant 4 : i32
    %33 = arith.addi %c0_i32, %c4_i32 : i32
    %c1_i32 = arith.constant 1 : i32
    scf.for %arg7 = %c0_i32 to %33 step %c1_i32  : i32 {
      %34 = arith.index_cast %arg7 : i32 to index
      %c0_23 = arith.constant 0 : index
      %c0_24 = arith.constant 0 : index
      %35 = vector.load %arg6[%34, %c0_23, %c0_24] : memref<4x16x384xf32, #tpu.memory_space<vmem>>, vector<1x16x384xf32>
      %36 = vector.shape_cast %35 : vector<1x16x384xf32> to vector<16x384xf32>
      %c0_i32_25 = arith.constant 0 : i32
      %c6_i32 = arith.constant 6 : i32
      %37 = arith.addi %c0_i32_25, %c6_i32 : i32
      %c1_i32_26 = arith.constant 1 : i32
      scf.for %arg8 = %c0_i32_25 to %37 step %c1_i32_26  : i32 {
        %c64_i32 = arith.constant 64 : i32
        %38 = arith.muli %arg8, %c64_i32 : i32
        %39 = tpu.assume_multiple %38, 64 : i32
        %40 = arith.index_cast %39 : i32 to index
        %c0_28 = arith.constant 0 : index
        %41 = vector.load %arg3[%40, %c0_28] : memref<384x16xf32, #tpu.memory_space<vmem>>, vector<64x16xf32>
        %cst_29 = arith.constant dense<0.000000e+00> : vector<64x384xf32>
        %42 = tpu.matmul %41, %36, %cst_29 {dimension_numbers = #tpu.dot_dimension_numbers<[1], [0], [0], [1], [0, 0, 1, 1], [], []>} : vector<64x16xf32>, vector<16x384xf32>, vector<64x384xf32> -> vector<64x384xf32>
        %43 = arith.index_cast %arg7 : i32 to index
        %44 = arith.index_cast %39 : i32 to index
        %c0_30 = arith.constant 0 : index
        %45 = vector.load %arg5[%43, %44, %c0_30] : memref<4x384x384xf32, #tpu.memory_space<vmem>>, vector<1x64x384xf32>
        %46 = vector.shape_cast %45 : vector<1x64x384xf32> to vector<64x384xf32>
        %47 = vector.shape_cast %42 : vector<64x384xf32> to vector<1x64x384xf32>
        tpu.vector_store %arg5[%43, %44, %c0_30], %47 {strides = array<i32>} : memref<4x384x384xf32, #tpu.memory_space<vmem>>, vector<1x64x384xf32>,
      }
      %c6_i32_27 = arith.constant 6 : i32
    }
    %c4_i32_22 = arith.constant 4 : i32
    return
  }
  func.func @transform_0(%arg0: i32) -> i32 {
    %c0_i32 = arith.constant 0 : i32
    %c0_i32_0 = arith.constant 0 : i32
    return %c0_i32 : i32
  }
  func.func @transform_1(%arg0: i32) -> (i32, i32, i32, i32) {
    %c0_i32 = arith.constant 0 : i32
    %c0_i32_0 = arith.constant 0 : i32
    %c0_i32_1 = arith.constant 0 : i32
    %c0_i32_2 = arith.constant 0 : i32
    return %arg0, %c0_i32, %c0_i32_0, %c0_i32_1 : i32, i32, i32, i32
  }
  func.func @transform_2(%arg0: i32) -> (i32, i32) {
    %c0_i32 = arith.constant 0 : i32
    %c0_i32_0 = arith.constant 0 : i32
    %c0_i32_1 = arith.constant 0 : i32
    return %c0_i32, %c0_i32_0 : i32, i32
  }
  func.func @transform_3(%arg0: i32) -> (i32, i32) {
    %c0_i32 = arith.constant 0 : i32
    %c0_i32_0 = arith.constant 0 : i32
    %c0_i32_1 = arith.constant 0 : i32
    return %c0_i32, %c0_i32_0 : i32, i32
  }
  func.func @transform_4(%arg0: i32) -> (i32, i32, i32) {
    %c0_i32 = arith.constant 0 : i32
    %c0_i32_0 = arith.constant 0 : i32
    %c0_i32_1 = arith.constant 0 : i32
    return %arg0, %c0_i32, %c0_i32_0 : i32, i32, i32
  }
}

</mosaic_0001>

<llo_original>
// kernel: tpu_custom_call.1
$region0: #{tpu_custom_call.1}
  #allocation0 [shape = 'u32[]', space=smem, size = 0x4, offset = 0x4, fixed_abs, tag = 'smem constant byte address 0x4 - core index']
  #allocation1 [shape = 'u32[144,128]{1,0:T(1,128)}', space=vmem, size = 0x12000, scoped, tag = 'internal scratch']
  #allocation2 [shape = 'f32[4,16,384]{2,1,0:T(8,128)}', space=vmem, size = 0x18000, scoped, tag = 'scratch operand']
  %s0 = inlined_call_operand.hbm [shape: f32[5], index: 0, kind: input, shape index: {}]
  %s1 = inlined_call_operand.hbm [shape: f32[4,4,16,16], index: 1, kind: input, shape index: {}]
  %s2 = inlined_call_operand.vmem [shape: f32[384,16], index: 2, kind: input, shape index: {}]
  %s3 = inlined_call_operand.hbm [shape: f32[16,384], index: 3, kind: input, shape index: {}]
  %s4 = inlined_call_operand.hbm [shape: f32[4,384,384], index: 4, kind: output, shape index: {}]
  %s5 = sld [smem:[#allocation0]]
  $region52: #{tpu_custom_call.1} parent=0
    _
  %s7 = ssub.s32 1, %s5
  %s8 = scalar_select 0, %s7, %s5
  $region1: #{tpu_custom_call.1} parent=0
    #allocation3 [shape = 'u8[512]{0}', space=smem, size = 0x200, scoped, tag = 'input window, operand 0, single buffered']
    #allocation4 [shape = 's32[1]{0}', space=sflag, size = 0x4, scoped, tag = 'scoped memory for tpu_custom_call.1']
    #allocation5 [shape = 's32[1]{0}', space=sflag, size = 0x4, scoped, tag = 'scoped memory for tpu_custom_call.1']
    #allocation6 [shape = 's32[1]{0}', space=sflag, size = 0x4, scoped, tag = 'scoped memory for tpu_custom_call.1']
    #allocation7 [shape = 'u8[131072]{0}', space=vmem, size = 0x20000, scoped, tag = 'input window, operand 1, single buffered']
    #allocation8 [shape = 'u8[24576]{0}', space=vmem, size = 0x6000, scoped, tag = 'input window, operand 3, single buffered']
    #allocation9 [shape = 's32[1]{0}', space=sflag, size = 0x4, scoped, tag = 'scoped memory for tpu_custom_call.1']
    #allocation10 [shape = 'u8[2359296]{0}', space=vmem, size = 0x240000, scoped, tag = 'output window, operand 0, single buffered']
    %9 = vsyncpa [#allocation6], 0
    %10 = vsyncpa [#allocation4], 0
    %11 = vsyncpa [#allocation9], 0
    %12 = vsyncpa [#allocation5], 0
    // Predicated region
    $region2: #{tpu_custom_call.1} parent=1 // pred_check
      _
    $region3: #{tpu_custom_call.1} parent=1 // pred_check_branch
      %14 = sbr.rel (0) target = $region5
    $region4: #{tpu_custom_call.1} parent=1 // pred_region
      %s16 = ssub.s32 16, 16
      %17 = vsyncadd [#allocation6], %s16
      %20 = dma.hbm_to_smem %s0, 16, [#allocation3], [#allocation6]
    $region5: #{tpu_custom_call.1} parent=1 // pred_fallthru
      _
    // Predicated region
    $region6: #{tpu_custom_call.1} parent=1 // pred_check
      _
    $region7: #{tpu_custom_call.1} parent=1 // pred_check_branch
      %22 = sbr.rel (0) target = $region9
    $region8: #{tpu_custom_call.1} parent=1 // pred_region
      %s24 = ssub.s32 4096, 4096
      %25 = vsyncadd [#allocation4], %s24
      %s26 = sshll.u32 [#allocation7], 4
      %s27 = int_to_ptr.vmem [resolvable:$true] %s26
      %32 = dma.hbm_to_vmem [thread:$0]  %s1, 4096, %s27, [#allocation4], 128, 128, 8
    $region9: #{tpu_custom_call.1} parent=1 // pred_fallthru
      _
    // Predicated region
    $region10: #{tpu_custom_call.1} parent=1 // pred_check
      _
    $region11: #{tpu_custom_call.1} parent=1 // pred_check_branch
      %34 = sbr.rel (0) target = $region13
    $region12: #{tpu_custom_call.1} parent=1 // pred_region
      _
    $region13: #{tpu_custom_call.1} parent=1 // pred_fallthru
      _
    // Predicated region
    $region14: #{tpu_custom_call.1} parent=1 // pred_check
      _
    $region15: #{tpu_custom_call.1} parent=1 // pred_check_branch
      %36 = sbr.rel (0) target = $region17
    $region16: #{tpu_custom_call.1} parent=1 // pred_region
      %s38 = ssub.s32 768, 768
      %39 = vsyncadd [#allocation9], %s38
      %s40 = sshll.u32 [#allocation8], 4
      %s41 = int_to_ptr.vmem [resolvable:$true] %s40
      %46 = dma.hbm_to_vmem [thread:$0]  %s3, 768, %s41, [#allocation9], 384, 384, 24
    $region17: #{tpu_custom_call.1} parent=1 // pred_fallthru
      _
    // Predicated region
    $region18: #{tpu_custom_call.1} parent=1 // pred_check
      _
    $region19: #{tpu_custom_call.1} parent=1 // pred_check_branch
      %48 = sbr.rel (0) target = $region21
    $region20: #{tpu_custom_call.1} parent=1 // pred_region
      %49 = dma.done [#allocation6], 16
    $region21: #{tpu_custom_call.1} parent=1 // pred_fallthru
      _
    // Predicated region
    $region22: #{tpu_custom_call.1} parent=1 // pred_check
      _
    $region23: #{tpu_custom_call.1} parent=1 // pred_check_branch
      %51 = sbr.rel (0) target = $region25
    $region24: #{tpu_custom_call.1} parent=1 // pred_region
      %52 = dma.done [#allocation4], 4096
    $region25: #{tpu_custom_call.1} parent=1 // pred_fallthru
      _
    // Predicated region
    $region26: #{tpu_custom_call.1} parent=1 // pred_check
      _
    $region27: #{tpu_custom_call.1} parent=1 // pred_check_branch
      %54 = sbr.rel (0) target = $region29
    $region28: #{tpu_custom_call.1} parent=1 // pred_region
      %55 = dma.done [#allocation9], 768
    $region29: #{tpu_custom_call.1} parent=1 // pred_fallthru
      _
    %56 = sfence
    %s57 = sld [smem:[#allocation3]]
    %v58 = vld [vmem:[#allocation7] sm:$0xff]
    %v59 = vld [vmem:[#allocation7 + $0x8] sm:$0xff]
    %v60 = vld [vmem:[#allocation7 + $0x40] sm:$0xff]
    %v61 = vld [vmem:[#allocation7 + $0x48] sm:$0xff]
    %v62 = vld [vmem:[#allocation7 + $0x80] sm:$0xff]
    %v63 = vld [vmem:[#allocation7 + $0x88] sm:$0xff]
    %v64 = vld [vmem:[#allocation7 + $0xc0] sm:$0xff]
    %v65 = vld [vmem:[#allocation7 + $0xc8] sm:$0xff]
    %v66 = vstv %s57
    %v67 = vmul.f32 %v66, %v58
    %v68 = vmul.f32 %v66, %v59
    %v69 = vmul.f32 %v66, %v60
    %v70 = vmul.f32 %v66, %v61
    %v71 = vmul.f32 %v66, %v62
    %v72 = vmul.f32 %v66, %v63
    %v73 = vmul.f32 %v66, %v64
    %v74 = vmul.f32 %v66, %v65
    %s75 = sld [smem:[#allocation3 + $0x1]]
    %s76 = scalar_lea.vmem [#allocation7], 16
    %v77 = vld [vmem:[%s76] sm:$0xff]
    %v78 = vld [vmem:[%s76 + $0x8] sm:$0xff]
    %v79 = vld [vmem:[%s76 + $0x40] sm:$0xff]
    %v80 = vld [vmem:[%s76 + $0x48] sm:$0xff]
    %v81 = vld [vmem:[%s76 + $0x80] sm:$0xff]
    %v82 = vld [vmem:[%s76 + $0x88] sm:$0xff]
    %v83 = vld [vmem:[%s76 + $0xc0] sm:$0xff]
    %v84 = vld [vmem:[%s76 + $0xc8] sm:$0xff]
    %v85 = vstv %s75
    %v86 = vmul.f32 %v85, %v77
    %v87 = vmul.f32 %v85, %v78
    %v88 = vmul.f32 %v85, %v79
    %v89 = vmul.f32 %v85, %v80
    %v90 = vmul.f32 %v85, %v81
    %v91 = vmul.f32 %v85, %v82
    %v92 = vmul.f32 %v85, %v83
    %v93 = vmul.f32 %v85, %v84
    %v94 = vadd.f32 %v67, %v86
    %v95 = vadd.f32 %v68, %v87
    %v96 = vadd.f32 %v69, %v88
    %v97 = vadd.f32 %v70, %v89
    %v98 = vadd.f32 %v71, %v90
    %v99 = vadd.f32 %v72, %v91
    %v100 = vadd.f32 %v73, %v92
    %v101 = vadd.f32 %v74, %v93
    %s102 = sld [smem:[#allocation3 + $0x2]]
    %s103 = scalar_lea.vmem [#allocation7], 32
    %v104 = vld [vmem:[%s103] sm:$0xff]
    %v105 = vld [vmem:[%s103 + $0x8] sm:$0xff]
    %v106 = vld [vmem:[%s103 + $0x40] sm:$0xff]
    %v107 = vld [vmem:[%s103 + $0x48] sm:$0xff]
    %v108 = vld [vmem:[%s103 + $0x80] sm:$0xff]
    %v109 = vld [vmem:[%s103 + $0x88] sm:$0xff]
    %v110 = vld [vmem:[%s103 + $0xc0] sm:$0xff]
    %v111 = vld [vmem:[%s103 + $0xc8] sm:$0xff]
    %v112 = vstv %s102
    %v113 = vmul.f32 %v112, %v104
    %v114 = vmul.f32 %v112, %v105
    %v115 = vmul.f32 %v112, %v106
    %v116 = vmul.f32 %v112, %v107
    %v117 = vmul.f32 %v112, %v108
    %v118 = vmul.f32 %v112, %v109
    %v119 = vmul.f32 %v112, %v110
    %v120 = vmul.f32 %v112, %v111
    %v121 = vadd.f32 %v94, %v113
    %v122 = vadd.f32 %v95, %v114
    %v123 = vadd.f32 %v96, %v115
    %v124 = vadd.f32 %v97, %v116
    %v125 = vadd.f32 %v98, %v117
    %v126 = vadd.f32 %v99, %v118
    %v127 = vadd.f32 %v100, %v119
    %v128 = vadd.f32 %v101, %v120
    %s129 = sld [smem:[#allocation3 + $0x3]]
    %s130 = scalar_lea.vmem [#allocation7], 48
    %v131 = vld [vmem:[%s130] sm:$0xff]
    %v132 = vld [vmem:[%s130 + $0x8] sm:$0xff]
    %v133 = vld [vmem:[%s130 + $0x40] sm:$0xff]
    %v134 = vld [vmem:[%s130 + $0x48] sm:$0xff]
    %v135 = vld [vmem:[%s130 + $0x80] sm:$0xff]
    %v136 = vld [vmem:[%s130 + $0x88] sm:$0xff]
    %v137 = vld [vmem:[%s130 + $0xc0] sm:$0xff]
    %v138 = vld [vmem:[%s130 + $0xc8] sm:$0xff]
    %v139 = vstv %s129
    %v140 = vmul.f32 %v139, %v131
    %v141 = vmul.f32 %v139, %v132
    %v142 = vmul.f32 %v139, %v133
    %v143 = vmul.f32 %v139, %v134
    %v144 = vmul.f32 %v139, %v135
    %v145 = vmul.f32 %v139, %v136
    %v146 = vmul.f32 %v139, %v137
    %v147 = vmul.f32 %v139, %v138
    %v148 = vadd.f32 %v121, %v140
    %v149 = vadd.f32 %v122, %v141
    %v150 = vadd.f32 %v123, %v142
    %v151 = vadd.f32 %v124, %v143
    %v152 = vadd.f32 %v125, %v144
    %v153 = vadd.f32 %v126, %v145
    %v154 = vadd.f32 %v127, %v146
    %v155 = vadd.f32 %v128, %v147
    %s156 = sld [smem:[#allocation3 + $0x4]]
    %v157 = vstv %s156
    %v158 = vadd.f32 %v148, %v157
    %v159 = vadd.f32 %v149, %v157
    %v160 = vadd.f32 %v150, %v157
    %v161 = vadd.f32 %v151, %v157
    %v162 = vadd.f32 %v152, %v157
    %v163 = vadd.f32 %v153, %v157
    %v164 = vadd.f32 %v154, %v157
    %v165 = vadd.f32 %v155, %v157
    %v166 = vmax.f32 %v158, 0.0
    %v167 = vmax.f32 %v159, 0.0
    %v168 = vmax.f32 %v160, 0.0
    %v169 = vmax.f32 %v161, 0.0
    %v170 = vmax.f32 %v162, 0.0
    %v171 = vmax.f32 %v163, 0.0
    %v172 = vmax.f32 %v164, 0.0
    %v173 = vmax.f32 %v165, 0.0
    %v174 = vld [vmem:[#allocation8] sm:$0xff]
    %v175 = vld [vmem:[#allocation8 + $0x8] sm:$0xff]
    %v176 = vld [vmem:[#allocation8 + $0x10] sm:$0xff]
    %v177 = vld [vmem:[#allocation8 + $0x18] sm:$0xff]
    %v178 = vld [vmem:[#allocation8 + $0x20] sm:$0xff]
    %v179 = vld [vmem:[#allocation8 + $0x28] sm:$0xff]
    %vm180 = vcmask 130048
    %v182 = vsel %vm180, %v166, 0
    %v185 = vsel %vm180, %v167, 0
    %v188 = vsel %vm180, %v168, 0
    %v191 = vsel %vm180, %v169, 0
    %v194 = vsel %vm180, %v170, 0
    %v197 = vsel %vm180, %v171, 0
    %v200 = vsel %vm180, %v172, 0
    %v203 = vsel %vm180, %v173, 0
    %205 = vmatprep.subr.mxu0 0.0
    %206 = vmatpush1.msra.mxu0 0.0
    %207 = vmatprep.subr.mxu0 0.0
    %208 = vmatpush1.msra.mxu0 0.0
    %209 = vmatprep.subr.mxu0 0.0
    %210 = vmatpush1.msra.mxu0 0.0
    %211 = vmatprep.subr.mxu0 0.0
    %212 = vmatpush1.msra.mxu0 0.0
    %213 = vmatprep.subr.mxu0 0.0
    %214 = vmatpush1.msra.mxu0 0.0
    %215 = vmatprep.subr.mxu0 0.0
    %216 = vmatpush1.msra.mxu0 0.0
    %217 = vmatprep.subr.mxu0 0.0
    %218 = vmatpush1.msra.mxu0 0.0
    %219 = vmatprep.subr.mxu0 0.0
    %220 = vmatpush1.msra.mxu0 0.0
    %221 = vmatprep.subr.mxu0 0.0
    %222 = vmatpush1.msra.mxu0 0.0
    %223 = vmatprep.subr.mxu0 0.0
    %224 = vmatpush1.msra.mxu0 0.0
    %225 = vmatprep.subr.mxu0 0.0
    %226 = vmatpush1.msra.mxu0 0.0
    %227 = vmatprep.subr.mxu0 0.0
    %228 = vmatpush1.msra.mxu0 0.0
    %229 = vmatprep.subr.mxu0 0.0
    %230 = vmatpush1.msra.mxu0 0.0
    %231 = vmatprep.subr.mxu0 0.0
    %232 = vmatpush1.msra.mxu0 0.0
    %233 = vmatprep.subr.mxu0 %v178
    %234 = vmatpush1.msra.mxu0 %v177
    %235 = vmatprep.subr.mxu0 %v175
    %236 = vmatpush1.msra.mxu0 %v174
    %237 = vmatprep.subr.mxu0 0.0
    %238 = vmatpush2.msra.mxu0 0.0
    %239 = vmatprep.subr.mxu0 0.0
    %240 = vmatpush2.msra.mxu0 0.0
    %241 = vmatprep.subr.mxu0 0.0
    %242 = vmatpush2.msra.mxu0 0.0
    %243 = vmatprep.subr.mxu0 0.0
    %244 = vmatpush2.msra.mxu0 0.0
    %245 = vmatprep.subr.mxu0 0.0
    %246 = vmatpush2.msra.mxu0 0.0
    %247 = vmatprep.subr.mxu0 0.0
    %248 = vmatpush2.msra.mxu0 0.0
    %249 = vmatprep.subr.mxu0 0.0
    %250 = vmatpush2.msra.mxu0 0.0
    %251 = vmatprep.subr.mxu0 0.0
    %252 = vmatpush2.msra.mxu0 0.0
    %253 = vmatprep.subr.mxu0 0.0
    %254 = vmatpush2.msra.mxu0 0.0
    %255 = vmatprep.subr.mxu0 0.0
    %256 = vmatpush2.msra.mxu0 0.0
    %257 = vmatprep.subr.mxu0 0.0
    %258 = vmatpush2.msra.mxu0 0.0
    %259 = vmatprep.subr.mxu0 0.0
    %260 = vmatpush2.msra.mxu0 0.0
    %261 = vmatprep.subr.mxu0 0.0
    %262 = vmatpush2.msra.mxu0 0.0
    %263 = vmatprep.subr.mxu0 0.0
    %264 = vmatpush2.msra.mxu0 0.0
    %265 = vmatprep.subr.mxu0 0.0
    %266 = vmatpush2.msra.mxu0 0.0
    %267 = vmatprep.subr.mxu0 0.0
    %268 = vmatpush2.msra.mxu0 0.0
    %269 = vmatprep.mubr.f32.mxu0 0.0
    %270 = vmatmul.mubr.f32.gmra.mxu0 %v182
    %v271 = vpop.f32.mrf.mxu0
    %v272 = vadd.f32 0.0, %v271
    %v273 = vpop.f32.mrf.mxu0
    %v274 = vadd.f32 0.0, %v273
    %275 = vmatprep.mubr.f32.mxu0 0.0
    %276 = vmatmul.mubr.f32.gmra.mxu0 %v185
    %v277 = vpop.f32.mrf.mxu0
    %v278 = vadd.f32 0.0, %v277
    %v279 = vpop.f32.mrf.mxu0
    %v280 = vadd.f32 0.0, %v279
    %281 = vmatprep.mubr.f32.mxu0 0.0
    %282 = vmatmul.mubr.f32.gmra.mxu0 %v188
    %v283 = vpop.f32.mrf.mxu0
    %v284 = vadd.f32 0.0, %v283
    %v285 = vpop.f32.mrf.mxu0
    %v286 = vadd.f32 0.0, %v285
    %287 = vmatprep.mubr.f32.mxu0 0.0
    %288 = vmatmul.mubr.f32.gmra.mxu0 %v191
    %v289 = vpop.f32.mrf.mxu0
    %v290 = vadd.f32 0.0, %v289
    %v291 = vpop.f32.mrf.mxu0
    %v292 = vadd.f32 0.0, %v291
    %293 = vmatprep.mubr.f32.mxu0 0.0
    %294 = vmatmul.mubr.f32.gmra.mxu0 %v194
    %v295 = vpop.f32.mrf.mxu0
    %v296 = vadd.f32 0.0, %v295
    %v297 = vpop.f32.mrf.mxu0
    %v298 = vadd.f32 0.0, %v297
    %299 = vmatprep.mubr.f32.mxu0 0.0
    %300 = vmatmul.mubr.f32.gmra.mxu0 %v197
    %v301 = vpop.f32.mrf.mxu0
    %v302 = vadd.f32 0.0, %v301
    %v303 = vpop.f32.mrf.mxu0
    %v304 = vadd.f32 0.0, %v303
    %305 = vmatprep.mubr.f32.mxu0 0.0
    %306 = vmatmul.mubr.f32.gmra.mxu0 %v200
    %v307 = vpop.f32.mrf.mxu0
    %v308 = vadd.f32 0.0, %v307
    %v309 = vpop.f32.mrf.mxu0
    %v310 = vadd.f32 0.0, %v309
    %311 = vmatprep.mubr.f32.mxu0 0.0
    %312 = vmatmul.mubr.f32.gmra.mxu0 %v203
    %v313 = vpop.f32.mrf.mxu0
    %v314 = vadd.f32 0.0, %v313
    %v315 = vpop.f32.mrf.mxu0
    %v316 = vadd.f32 0.0, %v315
    %317 = vdwg.mxu0
    %318 = vmatprep.subr.mxu0 0.0
    %319 = vmatpush1.msra.mxu0 0.0
    %320 = vmatprep.subr.mxu0 0.0
    %321 = vmatpush1.msra.mxu0 0.0
    %322 = vmatprep.subr.mxu0 0.0
    %323 = vmatpush1.msra.mxu0 0.0
    %324 = vmatprep.subr.mxu0 0.0
    %325 = vmatpush1.msra.mxu0 0.0
    %326 = vmatprep.subr.mxu0 0.0
    %327 = vmatpush1.msra.mxu0 0.0
    %328 = vmatprep.subr.mxu0 0.0
    %329 = vmatpush1.msra.mxu0 0.0
    %330 = vmatprep.subr.mxu0 0.0
    %331 = vmatpush1.msra.mxu0 0.0
    %332 = vmatprep.subr.mxu0 0.0
    %333 = vmatpush1.msra.mxu0 0.0
    %334 = vmatprep.subr.mxu0 0.0
    %335 = vmatpush1.msra.mxu0 0.0
    %336 = vmatprep.subr.mxu0 0.0
    %337 = vmatpush1.msra.mxu0 0.0
    %338 = vmatprep.subr.mxu0 0.0
    %339 = vmatpush1.msra.mxu0 0.0
    %340 = vmatprep.subr.mxu0 0.0
    %341 = vmatpush1.msra.mxu0 0.0
    %342 = vmatprep.subr.mxu0 0.0
    %343 = vmatpush1.msra.mxu0 0.0
    %344 = vmatprep.subr.mxu0 0.0
    %345 = vmatpush1.msra.mxu0 0.0
    %346 = vmatprep.subr.mxu0 0.0
    %347 = vmatpush1.msra.mxu0 %v179
    %348 = vmatprep.subr.mxu0 0.0
    %349 = vmatpush1.msra.mxu0 %v176
    %350 = vmatprep.subr.mxu0 0.0
    %351 = vmatpush2.msra.mxu0 0.0
    %352 = vmatprep.subr.mxu0 0.0
    %353 = vmatpush2.msra.mxu0 0.0
    %354 = vmatprep.subr.mxu0 0.0
    %355 = vmatpush2.msra.mxu0 0.0
    %356 = vmatprep.subr.mxu0 0.0
    %357 = vmatpush2.msra.mxu0 0.0
    %358 = vmatprep.subr.mxu0 0.0
    %359 = vmatpush2.msra.mxu0 0.0
    %360 = vmatprep.subr.mxu0 0.0
    %361 = vmatpush2.msra.mxu0 0.0
    %362 = vmatprep.subr.mxu0 0.0
    %363 = vmatpush2.msra.mxu0 0.0
    %364 = vmatprep.subr.mxu0 0.0
    %365 = vmatpush2.msra.mxu0 0.0
    %366 = vmatprep.subr.mxu0 0.0
    %367 = vmatpush2.msra.mxu0 0.0
    %368 = vmatprep.subr.mxu0 0.0
    %369 = vmatpush2.msra.mxu0 0.0
    %370 = vmatprep.subr.mxu0 0.0
    %371 = vmatpush2.msra.mxu0 0.0
    %372 = vmatprep.subr.mxu0 0.0
    %373 = vmatpush2.msra.mxu0 0.0
    %374 = vmatprep.subr.mxu0 0.0
    %375 = vmatpush2.msra.mxu0 0.0
    %376 = vmatprep.subr.mxu0 0.0
    %377 = vmatpush2.msra.mxu0 0.0
    %378 = vmatprep.subr.mxu0 0.0
    %379 = vmatpush2.msra.mxu0 0.0
    %380 = vmatprep.subr.mxu0 0.0
    %381 = vmatpush2.msra.mxu0 0.0
    %382 = vmatprep.mubr.f32.mxu0 0.0
    %383 = vmatmul.mubr.f32.gmra.mxu0 %v182
    %v384 = vpop.f32.mrf.mxu0
    %v385 = vadd.f32 0.0, %v384
    %v386 = vpop.f32.mrf.mxu0
    %387 = vmatprep.mubr.f32.mxu0 0.0
    %388 = vmatmul.mubr.f32.gmra.mxu0 %v185
    %v389 = vpop.f32.mrf.mxu0
    %v390 = vadd.f32 0.0, %v389
    %v391 = vpop.f32.mrf.mxu0
    %392 = vmatprep.mubr.f32.mxu0 0.0
    %393 = vmatmul.mubr.f32.gmra.mxu0 %v188
    %v394 = vpop.f32.mrf.mxu0
    %v395 = vadd.f32 0.0, %v394
    %v396 = vpop.f32.mrf.mxu0
    %397 = vmatprep.mubr.f32.mxu0 0.0
    %398 = vmatmul.mubr.f32.gmra.mxu0 %v191
    %v399 = vpop.f32.mrf.mxu0
    %v400 = vadd.f32 0.0, %v399
    %v401 = vpop.f32.mrf.mxu0
    %402 = vmatprep.mubr.f32.mxu0 0.0
    %403 = vmatmul.mubr.f32.gmra.mxu0 %v194
    %v404 = vpop.f32.mrf.mxu0
    %v405 = vadd.f32 0.0, %v404
    %v406 = vpop.f32.mrf.mxu0
    %407 = vmatprep.mubr.f32.mxu0 0.0
    %408 = vmatmul.mubr.f32.gmra.mxu0 %v197
    %v409 = vpop.f32.mrf.mxu0
    %v410 = vadd.f32 0.0, %v409
    %v411 = vpop.f32.mrf.mxu0
    %412 = vmatprep.mubr.f32.mxu0 0.0
    %413 = vmatmul.mubr.f32.gmra.mxu0 %v200
    %v414 = vpop.f32.mrf.mxu0
    %v415 = vadd.f32 0.0, %v414
    %v416 = vpop.f32.mrf.mxu0
    %417 = vmatprep.mubr.f32.mxu0 0.0
    %418 = vmatmul.mubr.f32.gmra.mxu0 %v203
    %v419 = vpop.f32.mrf.mxu0
    %v420 = vadd.f32 0.0, %v419
    %v421 = vpop.f32.mrf.mxu0
    %422 = vdwg.mxu0
    %423 = vst [vmem:[#allocation2] sm:$0xff] %v272
    %424 = vst [vmem:[#allocation2 + $0x8] sm:$0xff] %v274
    %425 = vst [vmem:[#allocation2 + $0x10] sm:$0xff] %v385
    %426 = vst [vmem:[#allocation2 + $0x18] sm:$0xff] %v278
    %427 = vst [vmem:[#allocation2 + $0x20] sm:$0xff] %v280
    %428 = vst [vmem:[#allocation2 + $0x28] sm:$0xff] %v390
    %429 = vst [vmem:[#allocation2 + $0x30] sm:$0xff] %v284
    %430 = vst [vmem:[#allocation2 + $0x38] sm:$0xff] %v286
    %431 = vst [vmem:[#allocation2 + $0x40] sm:$0xff] %v395
    %432 = vst [vmem:[#allocation2 + $0x48] sm:$0xff] %v290
    %433 = vst [vmem:[#allocation2 + $0x50] sm:$0xff] %v292
    %434 = vst [vmem:[#allocation2 + $0x58] sm:$0xff] %v400
    %435 = vst [vmem:[#allocation2 + $0x60] sm:$0xff] %v296
    %436 = vst [vmem:[#allocation2 + $0x68] sm:$0xff] %v298
    %437 = vst [vmem:[#allocation2 + $0x70] sm:$0xff] %v405
    %438 = vst [vmem:[#allocation2 + $0x78] sm:$0xff] %v302
    %439 = vst [vmem:[#allocation2 + $0x80] sm:$0xff] %v304
    %440 = vst [vmem:[#allocation2 + $0x88] sm:$0xff] %v410
    %441 = vst [vmem:[#allocation2 + $0x90] sm:$0xff] %v308
    %442 = vst [vmem:[#allocation2 + $0x98] sm:$0xff] %v310
    %443 = vst [vmem:[#allocation2 + $0xa0] sm:$0xff] %v415
    %444 = vst [vmem:[#allocation2 + $0xa8] sm:$0xff] %v314
    %445 = vst [vmem:[#allocation2 + $0xb0] sm:$0xff] %v316
    %446 = vst [vmem:[#allocation2 + $0xb8] sm:$0xff] %v420
    loop: start=0, step=1, limit=4
    $region30: #{tpu_custom_call.1} parent=1 // loop_pre_header
      _
    $region31: #{tpu_custom_call.1} parent=1 // loop_header
      %s448 = sphi 0, %s452
      %p449 = scmp.ge.s32.totalorder %s448, 4
    $region32: #{tpu_custom_call.1} parent=1 // loop_header_branch
      %451 = sbr.rel (%p449) target = $region36
    $region33: #{tpu_custom_call.1} parent=1 // loop_body
      %s453 = smul.u32 %s448, 6
      %s454 = smul.addr %s453, 8
      %s455 = scalar_lea.vmem [#allocation2], %s454
      %v456 = vld [vmem:[%s455] sm:$0xff]
      %v457 = vld [vmem:[%s455 + $0x8] sm:$0xff]
      %v458 = vld [vmem:[%s455 + $0x10] sm:$0xff]
      %v459 = vld [vmem:[%s455 + $0x18] sm:$0xff]
      %v460 = vld [vmem:[%s455 + $0x20] sm:$0xff]
      %v461 = vld [vmem:[%s455 + $0x28] sm:$0xff]
      loop: start=0, step=1, limit=6
      $region37: #{tpu_custom_call.1} parent=33 // loop_pre_header
        _
      $region38: #{tpu_custom_call.1} parent=33 // loop_header
        %s463 = sphi 0, %s467
        %p464 = scmp.ge.s32.totalorder %s463, 6
      $region39: #{tpu_custom_call.1} parent=33 // loop_header_branch
        %466 = sbr.rel (%p464) target = $region43
      $region40: #{tpu_custom_call.1} parent=33 // loop_body
        %s468 = smul.u32 %s463, 64
        %s469 = scalar_lea.vmem %s2, %s468
        %v470 = vld [vmem:[%s469] sm:$0xff]
        %v471 = vld [vmem:[%s469 + $0x8] sm:$0xff]
        %v472 = vld [vmem:[%s469 + $0x10] sm:$0xff]
        %v473 = vld [vmem:[%s469 + $0x18] sm:$0xff]
        %v474 = vld [vmem:[%s469 + $0x20] sm:$0xff]
        %v475 = vld [vmem:[%s469 + $0x28] sm:$0xff]
        %v476 = vld [vmem:[%s469 + $0x30] sm:$0xff]
        %v477 = vld [vmem:[%s469 + $0x38] sm:$0xff]
        %v479 = vsel %vm180, %v470, 0
        %v482 = vsel %vm180, %v471, 0
        %v485 = vsel %vm180, %v472, 0
        %v488 = vsel %vm180, %v473, 0
        %v491 = vsel %vm180, %v474, 0
        %v494 = vsel %vm180, %v475, 0
        %v497 = vsel %vm180, %v476, 0
        %v500 = vsel %vm180, %v477, 0
        %502 = vmatprep.subr.mxu0 0.0
        %503 = vmatpush1.msra.mxu0 0.0
        %504 = vmatprep.subr.mxu0 0.0
        %505 = vmatpush1.msra.mxu0 0.0
        %506 = vmatprep.subr.mxu0 0.0
        %507 = vmatpush1.msra.mxu0 0.0
        %508 = vmatprep.subr.mxu0 0.0
        %509 = vmatpush1.msra.mxu0 0.0
        %510 = vmatprep.subr.mxu0 0.0
        %511 = vmatpush1.msra.mxu0 0.0
        %512 = vmatprep.subr.mxu0 0.0
        %513 = vmatpush1.msra.mxu0 0.0
        %514 = vmatprep.subr.mxu0 0.0
        %515 = vmatpush1.msra.mxu0 0.0
        %516 = vmatprep.subr.mxu0 0.0
        %517 = vmatpush1.msra.mxu0 0.0
        %518 = vmatprep.subr.mxu0 0.0
        %519 = vmatpush1.msra.mxu0 0.0
        %520 = vmatprep.subr.mxu0 0.0
        %521 = vmatpush1.msra.mxu0 0.0
        %522 = vmatprep.subr.mxu0 0.0
        %523 = vmatpush1.msra.mxu0 0.0
        %524 = vmatprep.subr.mxu0 0.0
        %525 = vmatpush1.msra.mxu0 0.0
        %526 = vmatprep.subr.mxu0 0.0
        %527 = vmatpush1.msra.mxu0 0.0
        %528 = vmatprep.subr.mxu0 0.0
        %529 = vmatpush1.msra.mxu0 0.0
        %530 = vmatprep.subr.mxu0 %v460
        %531 = vmatpush1.msra.mxu0 %v459
        %532 = vmatprep.subr.mxu0 %v457
        %533 = vmatpush1.msra.mxu0 %v456
        %534 = vmatprep.subr.mxu0 0.0
        %535 = vmatpush2.msra.mxu0 0.0
        %536 = vmatprep.subr.mxu0 0.0
        %537 = vmatpush2.msra.mxu0 0.0
        %538 = vmatprep.subr.mxu0 0.0
        %539 = vmatpush2.msra.mxu0 0.0
        %540 = vmatprep.subr.mxu0 0.0
        %541 = vmatpush2.msra.mxu0 0.0
        %542 = vmatprep.subr.mxu0 0.0
        %543 = vmatpush2.msra.mxu0 0.0
        %544 = vmatprep.subr.mxu0 0.0
        %545 = vmatpush2.msra.mxu0 0.0
        %546 = vmatprep.subr.mxu0 0.0
        %547 = vmatpush2.msra.mxu0 0.0
        %548 = vmatprep.subr.mxu0 0.0
        %549 = vmatpush2.msra.mxu0 0.0
        %550 = vmatprep.subr.mxu0 0.0
        %551 = vmatpush2.msra.mxu0 0.0
        %552 = vmatprep.subr.mxu0 0.0
        %553 = vmatpush2.msra.mxu0 0.0
        %554 = vmatprep.subr.mxu0 0.0
        %555 = vmatpush2.msra.mxu0 0.0
        %556 = vmatprep.subr.mxu0 0.0
        %557 = vmatpush2.msra.mxu0 0.0
        %558 = vmatprep.subr.mxu0 0.0
        %559 = vmatpush2.msra.mxu0 0.0
        %560 = vmatprep.subr.mxu0 0.0
        %561 = vmatpush2.msra.mxu0 0.0
        %562 = vmatprep.subr.mxu0 0.0
        %563 = vmatpush2.msra.mxu0 0.0
        %564 = vmatprep.subr.mxu0 0.0
        %565 = vmatpush2.msra.mxu0 0.0
        %566 = vmatprep.mubr.f32.mxu0 0.0
        %567 = vmatmul.mubr.f32.gmra.mxu0 %v479
        %v568 = vpop.f32.mrf.mxu0
        %v569 = vadd.f32 0.0, %v568
        %v570 = vpop.f32.mrf.mxu0
        %v571 = vadd.f32 0.0, %v570
        %572 = vmatprep.mubr.f32.mxu0 0.0
        %573 = vmatmul.mubr.f32.gmra.mxu0 %v482
        %v574 = vpop.f32.mrf.mxu0
        %v575 = vadd.f32 0.0, %v574
        %v576 = vpop.f32.mrf.mxu0
        %v577 = vadd.f32 0.0, %v576
        %578 = vmatprep.mubr.f32.mxu0 0.0
        %579 = vmatmul.mubr.f32.gmra.mxu0 %v485
        %v580 = vpop.f32.mrf.mxu0
        %v581 = vadd.f32 0.0, %v580
        %v582 = vpop.f32.mrf.mxu0
        %v583 = vadd.f32 0.0, %v582
        %584 = vmatprep.mubr.f32.mxu0 0.0
        %585 = vmatmul.mubr.f32.gmra.mxu0 %v488
        %v586 = vpop.f32.mrf.mxu0
        %v587 = vadd.f32 0.0, %v586
        %v588 = vpop.f32.mrf.mxu0
        %v589 = vadd.f32 0.0, %v588
        %590 = vmatprep.mubr.f32.mxu0 0.0
        %591 = vmatmul.mubr.f32.gmra.mxu0 %v491
        %v592 = vpop.f32.mrf.mxu0
        %v593 = vadd.f32 0.0, %v592
        %v594 = vpop.f32.mrf.mxu0
        %v595 = vadd.f32 0.0, %v594
        %596 = vmatprep.mubr.f32.mxu0 0.0
        %597 = vmatmul.mubr.f32.gmra.mxu0 %v494
        %v598 = vpop.f32.mrf.mxu0
        %v599 = vadd.f32 0.0, %v598
        %v600 = vpop.f32.mrf.mxu0
        %v601 = vadd.f32 0.0, %v600
        %602 = vmatprep.mubr.f32.mxu0 0.0
        %603 = vmatmul.mubr.f32.gmra.mxu0 %v497
        %v604 = vpop.f32.mrf.mxu0
        %v605 = vadd.f32 0.0, %v604
        %v606 = vpop.f32.mrf.mxu0
        %v607 = vadd.f32 0.0, %v606
        %608 = vmatprep.mubr.f32.mxu0 0.0
        %609 = vmatmul.mubr.f32.gmra.mxu0 %v500
        %v610 = vpop.f32.mrf.mxu0
        %v611 = vadd.f32 0.0, %v610
        %v612 = vpop.f32.mrf.mxu0
        %v613 = vadd.f32 0.0, %v612
        %614 = vdwg.mxu0
        %615 = vmatprep.subr.mxu0 0.0
        %616 = vmatpush1.msra.mxu0 0.0
        %617 = vmatprep.subr.mxu0 0.0
        %618 = vmatpush1.msra.mxu0 0.0
        %619 = vmatprep.subr.mxu0 0.0
        %620 = vmatpush1.msra.mxu0 0.0
        %621 = vmatprep.subr.mxu0 0.0
        %622 = vmatpush1.msra.mxu0 0.0
        %623 = vmatprep.subr.mxu0 0.0
        %624 = vmatpush1.msra.mxu0 0.0
        %625 = vmatprep.subr.mxu0 0.0
        %626 = vmatpush1.msra.mxu0 0.0
        %627 = vmatprep.subr.mxu0 0.0
        %628 = vmatpush1.msra.mxu0 0.0
        %629 = vmatprep.subr.mxu0 0.0
        %630 = vmatpush1.msra.mxu0 0.0
        %631 = vmatprep.subr.mxu0 0.0
        %632 = vmatpush1.msra.mxu0 0.0
        %633 = vmatprep.subr.mxu0 0.0
        %634 = vmatpush1.msra.mxu0 0.0
        %635 = vmatprep.subr.mxu0 0.0
        %636 = vmatpush1.msra.mxu0 0.0
        %637 = vmatprep.subr.mxu0 0.0
        %638 = vmatpush1.msra.mxu0 0.0
        %639 = vmatprep.subr.mxu0 0.0
        %640 = vmatpush1.msra.mxu0 0.0
        %641 = vmatprep.subr.mxu0 0.0
        %642 = vmatpush1.msra.mxu0 0.0
        %643 = vmatprep.subr.mxu0 0.0
        %644 = vmatpush1.msra.mxu0 %v461
        %645 = vmatprep.subr.mxu0 0.0
        %646 = vmatpush1.msra.mxu0 %v458
        %647 = vmatprep.subr.mxu0 0.0
        %648 = vmatpush2.msra.mxu0 0.0
        %649 = vmatprep.subr.mxu0 0.0
        %650 = vmatpush2.msra.mxu0 0.0
        %651 = vmatprep.subr.mxu0 0.0
        %652 = vmatpush2.msra.mxu0 0.0
        %653 = vmatprep.subr.mxu0 0.0
        %654 = vmatpush2.msra.mxu0 0.0
        %655 = vmatprep.subr.mxu0 0.0
        %656 = vmatpush2.msra.mxu0 0.0
        %657 = vmatprep.subr.mxu0 0.0
        %658 = vmatpush2.msra.mxu0 0.0
        %659 = vmatprep.subr.mxu0 0.0
        %660 = vmatpush2.msra.mxu0 0.0
        %661 = vmatprep.subr.mxu0 0.0
        %662 = vmatpush2.msra.mxu0 0.0
        %663 = vmatprep.subr.mxu0 0.0
        %664 = vmatpush2.msra.mxu0 0.0
        %665 = vmatprep.subr.mxu0 0.0
        %666 = vmatpush2.msra.mxu0 0.0
        %667 = vmatprep.subr.mxu0 0.0
        %668 = vmatpush2.msra.mxu0 0.0
        %669 = vmatprep.subr.mxu0 0.0
        %670 = vmatpush2.msra.mxu0 0.0
        %671 = vmatprep.subr.mxu0 0.0
        %672 = vmatpush2.msra.mxu0 0.0
        %673 = vmatprep.subr.mxu0 0.0
        %674 = vmatpush2.msra.mxu0 0.0
        %675 = vmatprep.subr.mxu0 0.0
        %676 = vmatpush2.msra.mxu0 0.0
        %677 = vmatprep.subr.mxu0 0.0
        %678 = vmatpush2.msra.mxu0 0.0
        %679 = vmatprep.mubr.f32.mxu0 0.0
        %680 = vmatmul.mubr.f32.gmra.mxu0 %v479
        %v681 = vpop.f32.mrf.mxu0
        %v682 = vadd.f32 0.0, %v681
        %v683 = vpop.f32.mrf.mxu0
        %684 = vmatprep.mubr.f32.mxu0 0.0
        %685 = vmatmul.mubr.f32.gmra.mxu0 %v482
        %v686 = vpop.f32.mrf.mxu0
        %v687 = vadd.f32 0.0, %v686
        %v688 = vpop.f32.mrf.mxu0
        %689 = vmatprep.mubr.f32.mxu0 0.0
        %690 = vmatmul.mubr.f32.gmra.mxu0 %v485
        %v691 = vpop.f32.mrf.mxu0
        %v692 = vadd.f32 0.0, %v691
        %v693 = vpop.f32.mrf.mxu0
        %694 = vmatprep.mubr.f32.mxu0 0.0
        %695 = vmatmul.mubr.f32.gmra.mxu0 %v488
        %v696 = vpop.f32.mrf.mxu0
        %v697 = vadd.f32 0.0, %v696
        %v698 = vpop.f32.mrf.mxu0
        %699 = vmatprep.mubr.f32.mxu0 0.0
        %700 = vmatmul.mubr.f32.gmra.mxu0 %v491
        %v701 = vpop.f32.mrf.mxu0
        %v702 = vadd.f32 0.0, %v701
        %v703 = vpop.f32.mrf.mxu0
        %704 = vmatprep.mubr.f32.mxu0 0.0
        %705 = vmatmul.mubr.f32.gmra.mxu0 %v494
        %v706 = vpop.f32.mrf.mxu0
        %v707 = vadd.f32 0.0, %v706
        %v708 = vpop.f32.mrf.mxu0
        %709 = vmatprep.mubr.f32.mxu0 0.0
        %710 = vmatmul.mubr.f32.gmra.mxu0 %v497
        %v711 = vpop.f32.mrf.mxu0
        %v712 = vadd.f32 0.0, %v711
        %v713 = vpop.f32.mrf.mxu0
        %714 = vmatprep.mubr.f32.mxu0 0.0
        %715 = vmatmul.mubr.f32.gmra.mxu0 %v500
        %v716 = vpop.f32.mrf.mxu0
        %v717 = vadd.f32 0.0, %v716
        %v718 = vpop.f32.mrf.mxu0
        %719 = vdwg.mxu0
        %s720 = sshra.s32 %s468, 3
        %s721 = sand.u32 %s468, 7
        %s722 = smul.u32 %s720, 3
        %s723 = smul.u32 %s448, 144
        %s724 = sadd.s32 %s722, %s723
        %s725 = smul.addr %s724, 8
        %s726 = scalar_lea.vmem [#allocation10], %s725
        %727 = vst [vmem:[%s726] sm:$0xff] %v569
        %728 = vst [vmem:[%s726 + $0x8] sm:$0xff] %v571
        %729 = vst [vmem:[%s726 + $0x10] sm:$0xff] %v682
        %730 = vst [vmem:[%s726 + $0x18] sm:$0xff] %v575
        %731 = vst [vmem:[%s726 + $0x20] sm:$0xff] %v577
        %732 = vst [vmem:[%s726 + $0x28] sm:$0xff] %v687
        %733 = vst [vmem:[%s726 + $0x30] sm:$0xff] %v581
        %734 = vst [vmem:[%s726 + $0x38] sm:$0xff] %v583
        %735 = vst [vmem:[%s726 + $0x40] sm:$0xff] %v692
        %736 = vst [vmem:[%s726 + $0x48] sm:$0xff] %v587
        %737 = vst [vmem:[%s726 + $0x50] sm:$0xff] %v589
        %738 = vst [vmem:[%s726 + $0x58] sm:$0xff] %v697
        %739 = vst [vmem:[%s726 + $0x60] sm:$0xff] %v593
        %740 = vst [vmem:[%s726 + $0x68] sm:$0xff] %v595
        %741 = vst [vmem:[%s726 + $0x70] sm:$0xff] %v702
        %742 = vst [vmem:[%s726 + $0x78] sm:$0xff] %v599
        %743 = vst [vmem:[%s726 + $0x80] sm:$0xff] %v601
        %744 = vst [vmem:[%s726 + $0x88] sm:$0xff] %v707
        %745 = vst [vmem:[%s726 + $0x90] sm:$0xff] %v605
        %746 = vst [vmem:[%s726 + $0x98] sm:$0xff] %v607
        %747 = vst [vmem:[%s726 + $0xa0] sm:$0xff] %v712
        %748 = vst [vmem:[%s726 + $0xa8] sm:$0xff] %v611
        %749 = vst [vmem:[%s726 + $0xb0] sm:$0xff] %v613
        %750 = vst [vmem:[%s726 + $0xb8] sm:$0xff] %v717
      $region41: #{tpu_custom_call.1} parent=33 // loop_footer
        %s467 = sadd.s32 1, %s463
      $region42: #{tpu_custom_call.1} parent=33 // loop_footer_branch
        %462 = sbr.rel target = $region38
      $region43: #{tpu_custom_call.1} parent=33 // loop_exit
        _
    $region34: #{tpu_custom_call.1} parent=1 // loop_footer
      %s452 = sadd.s32 1, %s448
    $region35: #{tpu_custom_call.1} parent=1 // loop_footer_branch
      %447 = sbr.rel target = $region31
    $region36: #{tpu_custom_call.1} parent=1 // loop_exit
      _
    // Predicated region
    $region44: #{tpu_custom_call.1} parent=1 // pred_check
      _
    $region45: #{tpu_custom_call.1} parent=1 // pred_check_branch
      %752 = sbr.rel (0) target = $region47
    $region46: #{tpu_custom_call.1} parent=1 // pred_region
      %s754 = ssub.s32 73728, 73728
      %755 = vsyncadd [#allocation5], %s754
      %s756 = sshll.u32 [#allocation10], 4
      %s757 = int_to_ptr.vmem [resolvable:$true] %s756
      %762 = dma.vmem_to_hbm [thread:$0]  %s757, 73728, %s4, [#allocation5], 384, 384, 24
    $region47: #{tpu_custom_call.1} parent=1 // pred_fallthru
      _
    // Predicated region
    $region48: #{tpu_custom_call.1} parent=1 // pred_check
      _
    $region49: #{tpu_custom_call.1} parent=1 // pred_check_branch
      %764 = sbr.rel (0) target = $region51
    $region50: #{tpu_custom_call.1} parent=1 // pred_region
      %765 = dma.done [#allocation5], 73728
    $region51: #{tpu_custom_call.1} parent=1 // pred_fallthru
      _
    %766 = vsyncpa [#allocation4], 1
    %767 = vsyncpa [#allocation9], 1
    %768 = vsyncpa [#allocation5], 1
    %769 = vsyncpa [#allocation6], 1

</llo_original>
